<compile_context>
chip_gen: v7x
topology: tpu7x:2x2x1
jax: 0.10.0
libtpu: 0.0.40
codegen_flags: <defaults>
</compile_context>

<pallas_src>
import functools

import jax
import jax.numpy as jnp
from jax.experimental import pallas as pl
from jax.experimental.pallas import tpu as pltpu

_LANE = 128
_LOG2 = 0.6931471805599453


def _round_up(x: int, m: int) -> int:
    return ((x + m - 1) // m) * m


def _laplace_nll_kernel(loc_ref, scale_ref, targ_ref, out_ref, acc_ref, *,
                        eps, tile_rows):
    t = pl.program_id(1)

    @pl.when(t == 0)
    def _init():
        acc_ref[...] = jnp.zeros_like(acc_ref)

    loc = loc_ref[...].astype(jnp.float32)                               # (tile_rows, 128)
    scale = jnp.maximum(scale_ref[...].astype(jnp.float32), jnp.float32(eps))
    targ = targ_ref[...].astype(jnp.float32)

    # log(2*scale) = log(2) + log(scale); division via reciprocal on the EUP.
    # (pl.reciprocal(..., approx=True) would be faster but perturbs the result
    #  at ~1e-3 relative; keep the exact form for parity with the reference.)
    recip = pl.reciprocal(scale, approx=False)
    nll = (jnp.float32(_LOG2) + jnp.log(scale)) + jnp.abs(targ - loc) * recip

    # VALU-only partial reduction into the (8,128) vector accumulator.
    acc_ref[...] += jnp.sum(nll.reshape(tile_rows // 8, 8, _LANE), axis=0)

    @pl.when(t == pl.num_programs(1) - 1)
    def _finalize():
        # Single cross-lane/sublane reduce per partial; the mean scaling is
        # applied in the wrapper after summing the per-core partials.
        out_ref[0, 0] = jnp.sum(acc_ref[...])


def laplace_nll_loss(pred, target, eps: float = 1e-6, max_tile_rows: int = 2048):
    """Mean Laplace NLL. pred: (..., 2*D), target: (..., D)."""
    assert pred.shape[:-1] == target.shape[:-1]
    assert pred.shape[-1] == 2 * target.shape[-1]

    d = target.shape[-1]
    numel = int(target.size)

    # Split loc / scale in the wrapper so both halves arrive lane-aligned,
    # then flatten and lay the data out lane-dense as (rows, 128).
    loc = pred[..., :d].reshape(-1)
    scale = pred[..., d:].reshape(-1)
    targ = target.reshape(-1)

    rows_needed = _round_up(numel, _LANE) // _LANE
    tile_rows = max(8, min(_round_up(max_tile_rows, 8), _round_up(rows_needed, 8)))
    num_row_tiles = _round_up(rows_needed, tile_rows) // tile_rows
    total_rows = num_row_tiles * tile_rows
    pad = total_rows * _LANE - numel

    # Zero-contribution padding: loc=0, target=0, scale=0.5
    #   -> log(2*0.5) + |0-0|/0.5 == 0, so padded elements never affect the sum.
    loc = jnp.pad(loc, (0, pad), constant_values=0).reshape(total_rows, _LANE)
    scale = jnp.pad(scale, (0, pad), constant_values=0.5).reshape(total_rows, _LANE)
    targ = jnp.pad(targ, (0, pad), constant_values=0).reshape(total_rows, _LANE)

    # Leading parallel axis: split the row tiles into independent partial sums
    # so megacore chips (v7x: 2 TensorCores) can each take half the rows.
    num_parallel = 2 if (num_row_tiles >= 2 and num_row_tiles % 2 == 0) else 1
    tiles_per_core = num_row_tiles // num_parallel

    def in_map(p, t, _tpc=tiles_per_core):
        return (p * _tpc + t, 0)

    kernel = functools.partial(_laplace_nll_kernel, eps=eps, tile_rows=tile_rows)

    partials = pl.pallas_call(
        kernel,
        out_shape=jax.ShapeDtypeStruct((num_parallel, 1), jnp.float32),
        grid_spec=pltpu.PrefetchScalarGridSpec(
            num_scalar_prefetch=0,
            grid=(num_parallel, tiles_per_core),
            in_specs=[
                pl.BlockSpec((tile_rows, _LANE), in_map),   # loc
                pl.BlockSpec((tile_rows, _LANE), in_map),   # scale
                pl.BlockSpec((tile_rows, _LANE), in_map),   # target
            ],
            out_specs=pl.BlockSpec((1, 1), lambda p, t: (p, 0),
                                   memory_space=pltpu.SMEM),
            scratch_shapes=[pltpu.VMEM((8, _LANE), jnp.float32)],
        ),
        compiler_params=pltpu.CompilerParams(
            dimension_semantics=("parallel", "arbitrary"),
            vmem_limit_bytes=32 * 1024 * 1024,
        ),
    )(loc, scale, targ)

    return jnp.sum(partials) * jnp.float32(1.0 / numel)


def laplace_nll_loss_ref(pred, target, eps: float = 1e-6):
    d = target.shape[-1]
    loc, scale = pred[..., :d], pred[..., d:]
    scale = jnp.maximum(scale, eps)
    nll = jnp.log(2.0 * scale) + jnp.abs(target - loc) / scale
    return jnp.mean(nll)


if __name__ == "__main__":
    key = jax.random.PRNGKey(0)
    k1, k2 = jax.random.split(key)

    # pred: (batch=2, seq=16, 2*D=32) -> loc/scale each (2, 16, 16)
    pred = jax.random.normal(k1, (2, 16, 32), dtype=jnp.float32)
    target = jax.random.normal(k2, (2, 16, 16), dtype=jnp.float32)

    out = jax.block_until_ready(laplace_nll_loss(pred, target))
    ref = laplace_nll_loss_ref(pred, target)
    assert jnp.allclose(out, ref, rtol=1e-5, atol=1e-5), (out, ref)

    # Odd, non-divisible shape exercises the padding / tail-handling path.
    k3, k4 = jax.random.split(k1)
    pred2 = jax.random.normal(k3, (3, 7, 10), dtype=jnp.float32)
    target2 = jax.random.normal(k4, (3, 7, 5), dtype=jnp.float32)
    out2 = jax.block_until_ready(laplace_nll_loss(pred2, target2))
    ref2 = laplace_nll_loss_ref(pred2, target2)
    assert jnp.allclose(out2, ref2, rtol=1e-5, atol=1e-5), (out2, ref2)

    print("KERNEL_OK")
</pallas_src>

<mosaic_0001>
module attributes {stable_mosaic.version = 11 : i64} {
  func.func @_laplace_nll_kernel(%arg0: i32, %arg1: i32, %arg2: memref<8x128xf32, #tpu.memory_space<vmem>>, %arg3: memref<8x128xf32, #tpu.memory_space<vmem>>, %arg4: memref<8x128xf32, #tpu.memory_space<vmem>>, %arg5: memref<1x1xf32, #tpu.memory_space<smem>>, %arg6: memref<8x128xf32, #tpu.memory_space<vmem>>) attributes {dimension_semantics = [#tpu.dimension_semantics<parallel>, #tpu.dimension_semantics<arbitrary>], iteration_bounds = array<i64: 1, 1>, scalar_prefetch = 0 : i64, scratch_operands = 1 : i64, tpu.core_type = #tpu.core_type<tc>, window_params = [{transform_indices = @transform_0, window_bounds = array<i64: 8, 128>}, {transform_indices = @transform_1, window_bounds = array<i64: 8, 128>}, {transform_indices = @transform_2, window_bounds = array<i64: 8, 128>}, {transform_indices = @transform_3, window_bounds = array<i64: 1, 1>}]} {
    %c0_i32 = arith.constant 0 : i32
    %0 = arith.cmpi eq, %arg1, %c0_i32 : i32
    %1 = arith.extui %0 : i1 to i32
    %c0_i32_0 = arith.constant 0 : i32
    %2 = arith.cmpi ne, %1, %c0_i32_0 : i32
    scf.if %2 {
      %cst_14 = arith.constant 0.000000e+00 : f32
      %24 = vector.broadcast %cst_14 : f32 to vector<8x128xf32>
      %c0_15 = arith.constant 0 : index
      %c0_16 = arith.constant 0 : index
      %25 = vector.load %arg6[%c0_15, %c0_16] : memref<8x128xf32, #tpu.memory_space<vmem>>, vector<8x128xf32>
      tpu.vector_store %arg6[%c0_15, %c0_16], %24 {strides = array<i32>} : memref<8x128xf32, #tpu.memory_space<vmem>>, vector<8x128xf32>,
    } else {
    }
    %c0 = arith.constant 0 : index
    %c0_1 = arith.constant 0 : index
    %3 = vector.load %arg2[%c0, %c0_1] : memref<8x128xf32, #tpu.memory_space<vmem>>, vector<8x128xf32>
    %c0_2 = arith.constant 0 : index
    %c0_3 = arith.constant 0 : index
    %4 = vector.load %arg3[%c0_2, %c0_3] : memref<8x128xf32, #tpu.memory_space<vmem>>, vector<8x128xf32>
    %cst = arith.constant 9.99999997E-7 : f32
    %5 = vector.broadcast %cst : f32 to vector<8x128xf32>
    %6 = arith.maximumf %4, %5 : vector<8x128xf32>
    %c0_4 = arith.constant 0 : index
    %c0_5 = arith.constant 0 : index
    %7 = vector.load %arg4[%c0_4, %c0_5] : memref<8x128xf32, #tpu.memory_space<vmem>>, vector<8x128xf32>
    %8 = tpu.reciprocal %6 : vector<8x128xf32> -> vector<8x128xf32>
    %9 = math.log %6 : vector<8x128xf32>
    %cst_6 = arith.constant 0.693147182 : f32
    %10 = vector.broadcast %cst_6 : f32 to vector<8x128xf32>
    %11 = arith.addf %10, %9 : vector<8x128xf32>
    %12 = arith.subf %7, %3 : vector<8x128xf32>
    %13 = math.absf %12 : vector<8x128xf32>
    %14 = arith.mulf %13, %8 : vector<8x128xf32>
    %15 = arith.addf %11, %14 : vector<8x128xf32>
    %c0_7 = arith.constant 0 : index
    %c0_8 = arith.constant 0 : index
    %16 = vector.load %arg6[%c0_7, %c0_8] : memref<8x128xf32, #tpu.memory_space<vmem>>, vector<8x128xf32>
    %17 = vector.shape_cast %15 : vector<8x128xf32> to vector<1x8x128xf32>
    %cst_9 = arith.constant dense<0.000000e+00> : vector<8x128xf32>
    %18 = vector.multi_reduction <add>, %17, %cst_9 [0] : vector<1x8x128xf32> to vector<8x128xf32>
    %19 = arith.addf %16, %18 : vector<8x128xf32>
    %c0_10 = arith.constant 0 : index
    %c0_11 = arith.constant 0 : index
    %20 = vector.load %arg6[%c0_10, %c0_11] : memref<8x128xf32, #tpu.memory_space<vmem>>, vector<8x128xf32>
    tpu.vector_store %arg6[%c0_10, %c0_11], %19 {strides = array<i32>} : memref<8x128xf32, #tpu.memory_space<vmem>>, vector<8x128xf32>,
    %c0_i32_12 = arith.constant 0 : i32
    %21 = arith.cmpi eq, %arg1, %c0_i32_12 : i32
    %22 = arith.extui %21 : i1 to i32
    %c0_i32_13 = arith.constant 0 : i32
    %23 = arith.cmpi ne, %22, %c0_i32_13 : i32
    scf.if %23 {
      %c0_14 = arith.constant 0 : index
      %c0_15 = arith.constant 0 : index
      %24 = vector.load %arg6[%c0_14, %c0_15] : memref<8x128xf32, #tpu.memory_space<vmem>>, vector<8x128xf32>
      %25 = vector.shape_cast %24 : vector<8x128xf32> to vector<1x8x128xf32>
      %cst_16 = arith.constant dense<0.000000e+00> : vector<1xf32>
      %26 = vector.multi_reduction <add>, %25, %cst_16 [1, 2] : vector<1x8x128xf32> to vector<1xf32>
      %27 = vector.shape_cast %26 : vector<1xf32> to vector<1x1x1xf32>
      %28 = vector.extract %27[0, 0, 0] : f32 from vector<1x1x1xf32>
      %c0_17 = arith.constant 0 : index
      %c0_18 = arith.constant 0 : index
      %29 = memref.load %arg5[%c0_17, %c0_18] : memref<1x1xf32, #tpu.memory_space<smem>>
      memref.store %28, %arg5[%c0_17, %c0_18] : memref<1x1xf32, #tpu.memory_space<smem>>
    } else {
    }
    return
  }
  func.func @transform_0(%arg0: i32, %arg1: i32) -> (i32, i32) {
    %c1_i32 = arith.constant 1 : i32
    %0 = arith.muli %arg0, %c1_i32 : i32
    %1 = arith.addi %0, %arg1 : i32
    %c0_i32 = arith.constant 0 : i32
    %c0_i32_0 = arith.constant 0 : i32
    return %1, %c0_i32 : i32, i32
  }
  func.func @transform_1(%arg0: i32, %arg1: i32) -> (i32, i32) {
    %c1_i32 = arith.constant 1 : i32
    %0 = arith.muli %arg0, %c1_i32 : i32
    %1 = arith.addi %0, %arg1 : i32
    %c0_i32 = arith.constant 0 : i32
    %c0_i32_0 = arith.constant 0 : i32
    return %1, %c0_i32 : i32, i32
  }
  func.func @transform_2(%arg0: i32, %arg1: i32) -> (i32, i32) {
    %c1_i32 = arith.constant 1 : i32
    %0 = arith.muli %arg0, %c1_i32 : i32
    %1 = arith.addi %0, %arg1 : i32
    %c0_i32 = arith.constant 0 : i32
    %c0_i32_0 = arith.constant 0 : i32
    return %1, %c0_i32 : i32, i32
  }
  func.func @transform_3(%arg0: i32, %arg1: i32) -> (i32, i32) {
    %c0_i32 = arith.constant 0 : i32
    %c0_i32_0 = arith.constant 0 : i32
    return %arg0, %c0_i32 : i32, i32
  }
}

</mosaic_0001>

<llo_original>
// kernel: tpu_custom_call.1
$region0: #{tpu_custom_call.1}
  #allocation0 [shape = 'u32[]', space=smem, size = 0x4, offset = 0x4, fixed_abs, tag = 'smem constant byte address 0x4 - core index']
  #allocation1 [shape = 'u32[144,128]{1,0:T(1,128)}', space=vmem, size = 0x12000, scoped, tag = 'internal scratch']
  #allocation2 [shape = 'f32[8,128]{1,0:T(8,128)}', space=vmem, size = 0x1000, scoped, tag = 'scratch operand']
  %s0 = inlined_call_operand.hbm [shape: f32[8,128], index: 0, kind: input, shape index: {}]
  %s1 = inlined_call_operand.hbm [shape: f32[8,128], index: 1, kind: input, shape index: {}]
  %s2 = inlined_call_operand.hbm [shape: f32[8,128], index: 2, kind: input, shape index: {}]
  %s3 = inlined_call_operand.hbm [shape: f32[1,1], index: 3, kind: output, shape index: {}]
  %s4 = sld [smem:[#allocation0]]
  $region42: #{tpu_custom_call.1} parent=0
    _
  %s6 = ssub.s32 1, %s4
  %s7 = scalar_select 0, %s6, %s4
  $region1: #{tpu_custom_call.1} parent=0
    #allocation3 [shape = 'u8[4096]{0}', space=vmem, size = 0x1000, scoped, tag = 'input window, operand 0, single buffered']
    #allocation4 [shape = 's32[1]{0}', space=sflag, size = 0x4, scoped, tag = 'scoped memory for tpu_custom_call.1']
    #allocation5 [shape = 's32[1]{0}', space=sflag, size = 0x4, scoped, tag = 'scoped memory for tpu_custom_call.1']
    #allocation6 [shape = 'u8[4096]{0}', space=vmem, size = 0x1000, scoped, tag = 'input window, operand 1, single buffered']
    #allocation7 [shape = 's32[1]{0}', space=sflag, size = 0x4, scoped, tag = 'scoped memory for tpu_custom_call.1']
    #allocation8 [shape = 'u8[4096]{0}', space=vmem, size = 0x1000, scoped, tag = 'input window, operand 2, single buffered']
    #allocation9 [shape = 'u8[512]{0}', space=smem, size = 0x200, scoped, tag = 'output window, operand 0, single buffered']
    %8 = vsyncpa [#allocation4], 0
    %9 = vsyncpa [#allocation7], 0
    %10 = vsyncpa [#allocation5], 0
    // Predicated region
    $region2: #{tpu_custom_call.1} parent=1 // pred_check
      _
    $region3: #{tpu_custom_call.1} parent=1 // pred_check_branch
      %12 = sbr.rel (0) target = $region5
    $region4: #{tpu_custom_call.1} parent=1 // pred_region
      %s13 = sadd.s32 0, 0
      %s15 = ssub.s32 128, 128
      %16 = vsyncadd [#allocation4], %s15
      %s17 = smul.addr %s13, 128
      %s18 = scalar_lea.hbm %s0, %s17
      %s20 = sshll.u32 [#allocation3], 4
      %s21 = int_to_ptr.vmem [resolvable:$true] %s20
      %23 = dma.hbm_to_vmem [thread:$0]  %s18, 128, %s21, [#allocation4]
    $region5: #{tpu_custom_call.1} parent=1 // pred_fallthru
      _
    // Predicated region
    $region6: #{tpu_custom_call.1} parent=1 // pred_check
      _
    $region7: #{tpu_custom_call.1} parent=1 // pred_check_branch
      %25 = sbr.rel (0) target = $region9
    $region8: #{tpu_custom_call.1} parent=1 // pred_region
      %s26 = sadd.s32 0, 0
      %s28 = ssub.s32 128, 128
      %29 = vsyncadd [#allocation7], %s28
      %s30 = smul.addr %s26, 128
      %s31 = scalar_lea.hbm %s1, %s30
      %s33 = sshll.u32 [#allocation6], 4
      %s34 = int_to_ptr.vmem [resolvable:$true] %s33
      %36 = dma.hbm_to_vmem [thread:$0]  %s31, 128, %s34, [#allocation7]
    $region9: #{tpu_custom_call.1} parent=1 // pred_fallthru
      _
    // Predicated region
    $region10: #{tpu_custom_call.1} parent=1 // pred_check
      _
    $region11: #{tpu_custom_call.1} parent=1 // pred_check_branch
      %38 = sbr.rel (0) target = $region13
    $region12: #{tpu_custom_call.1} parent=1 // pred_region
      %s39 = sadd.s32 0, 0
      %s41 = ssub.s32 128, 128
      %42 = vsyncadd [#allocation7], %s41
      %s43 = smul.addr %s39, 128
      %s44 = scalar_lea.hbm %s2, %s43
      %s46 = sshll.u32 [#allocation8], 4
      %s47 = int_to_ptr.vmem [resolvable:$true] %s46
      %49 = dma.hbm_to_vmem [thread:$0]  %s44, 128, %s47, [#allocation7]
    $region13: #{tpu_custom_call.1} parent=1 // pred_fallthru
      _
    // Predicated region
    $region14: #{tpu_custom_call.1} parent=1 // pred_check
      _
    $region15: #{tpu_custom_call.1} parent=1 // pred_check_branch
      %51 = sbr.rel (0) target = $region17
    $region16: #{tpu_custom_call.1} parent=1 // pred_region
      %52 = dma.done [#allocation4], 128
    $region17: #{tpu_custom_call.1} parent=1 // pred_fallthru
      _
    // Predicated region
    $region18: #{tpu_custom_call.1} parent=1 // pred_check
      _
    $region19: #{tpu_custom_call.1} parent=1 // pred_check_branch
      %54 = sbr.rel (0) target = $region21
    $region20: #{tpu_custom_call.1} parent=1 // pred_region
      %55 = dma.done [#allocation7], 128
    $region21: #{tpu_custom_call.1} parent=1 // pred_fallthru
      _
    // Predicated region
    $region22: #{tpu_custom_call.1} parent=1 // pred_check
      _
    $region23: #{tpu_custom_call.1} parent=1 // pred_check_branch
      %57 = sbr.rel (0) target = $region25
    $region24: #{tpu_custom_call.1} parent=1 // pred_region
      %58 = dma.done [#allocation7], 128
    $region25: #{tpu_custom_call.1} parent=1 // pred_fallthru
      _
    %s59 = sadd.s32 0, 0
    %s60 = sadd.s32 0, 0
    %s61 = sadd.s32 0, 0
    %p62 = scmp.eq.s32.totalorder 0, 0
    // Predicated region
    $region26: #{tpu_custom_call.1} parent=1 // pred_check
      %p63 = pneg %p62
    $region27: #{tpu_custom_call.1} parent=1 // pred_check_branch
      %65 = sbr.rel (%p63) target = $region29
    $region28: #{tpu_custom_call.1} parent=1 // pred_region
      %66 = vst [vmem:[#allocation2] sm:$0xff] 0.0
    $region29: #{tpu_custom_call.1} parent=1 // pred_fallthru
      _
    %v67 = vld [vmem:[#allocation3] sm:$0xff]
    %v68 = vld [vmem:[#allocation6] sm:$0xff]
    %v69 = vmax.f32 %v68, 1e-06
    %v70 = vld [vmem:[#allocation8] sm:$0xff]
    %v71 = vrcp.pop %v69
    %v72 = vlog2.pop %v69
    %v73 = vmul.f32 %v72, 0.6931472
    %v74 = vadd.f32 %v73, 0.6931472
    %v75 = vsub.f32 %v70, %v67
    %v76 = vand.u32 2147483647, %v75
    %v77 = vmul.f32 %v76, %v71
    %v78 = vadd.f32 %v74, %v77
    %v79 = vld [vmem:[#allocation2] sm:$0xff]
    %v80 = vadd.f32 %v78, 0.0
    %v81 = vadd.f32 %v79, %v80
    %82 = vst [vmem:[#allocation2] sm:$0xff] %v81
    // Predicated region
    $region30: #{tpu_custom_call.1} parent=1 // pred_check
      %p83 = pneg %p62
    $region31: #{tpu_custom_call.1} parent=1 // pred_check_branch
      %85 = sbr.rel (%p83) target = $region33
    $region32: #{tpu_custom_call.1} parent=1 // pred_region
      %v86 = vld [vmem:[#allocation2] sm:$0xff]
      %87 = vadd.xlane.f32.xlu0 %v86
      %v88 = vpop.xlane.xlu0 %87
      %v89 = vrot.slane %v88, 4
      %v90 = vadd.f32 %v88, %v89
      %v91 = vrot.slane %v90, 2
      %v92 = vadd.f32 %v90, %v91
      %v93 = vrot.slane %v92, 1
      %v94 = vadd.f32 %v92, %v93
      %s95 = vtos %v94
      %s96 = scalar_lea.smem [#allocation9], 0
      %97 = sst [smem:[%s96]] %s95
    $region33: #{tpu_custom_call.1} parent=1 // pred_fallthru
      _
    // Predicated region
    $region34: #{tpu_custom_call.1} parent=1 // pred_check
      _
    $region35: #{tpu_custom_call.1} parent=1 // pred_check_branch
      %99 = sbr.rel (0) target = $region37
    $region36: #{tpu_custom_call.1} parent=1 // pred_region
      %s101 = ssub.s32 16, 16
      %102 = vsyncadd [#allocation5], %s101
      %105 = dma.smem_to_hbm [#allocation9], 16, %s3, [#allocation5]
    $region37: #{tpu_custom_call.1} parent=1 // pred_fallthru
      _
    // Predicated region
    $region38: #{tpu_custom_call.1} parent=1 // pred_check
      _
    $region39: #{tpu_custom_call.1} parent=1 // pred_check_branch
      %107 = sbr.rel (0) target = $region41
    $region40: #{tpu_custom_call.1} parent=1 // pred_region
      %108 = dma.done [#allocation5], 16
    $region41: #{tpu_custom_call.1} parent=1 // pred_fallthru
      _
    %109 = sfence
    %110 = vsyncpa [#allocation4], 1
    %111 = vsyncpa [#allocation7], 1
    %112 = vsyncpa [#allocation5], 1

</llo_original>
